<compile_context>
chip_gen: v6e
topology: v6e:2x2x1
jax: 0.10.0
libtpu: 0.0.40
codegen_flags: <defaults>
</compile_context>

<pallas_src>
import functools

import numpy as np
import jax
import jax.numpy as jnp
from jax.experimental import pallas as pl
from jax.experimental.pallas import tpu as pltpu

LOG_STD_MAX = 2.0
LOG_STD_MIN = -20.0

_LANE = 128
_SUBLANE = 8


def _round_up(x, m):
    return ((x + m - 1) // m) * m


# ----------------------------------------------------------------------------
# Glue (plain JAX): history gather / concat, identical to the PyTorch helper.
# ----------------------------------------------------------------------------
def build_obs_history(obs_history, history_indexes, extra_obs=None):
    T = obs_history.shape[1]
    if extra_obs is not None:
        data = [obs_history[:, T + idx + 1, :] for idx in history_indexes[1:]]
        data.append(extra_obs)
    else:
        data = [obs_history[:, T + idx, :] for idx in history_indexes]
    return jnp.concatenate(data, axis=-1)


# ----------------------------------------------------------------------------
# Pallas kernel: MLP trunk + fused heads + squashed-gaussian sample, log-prob,
# tanh squash and action-space rescale.  Static flags specialize the kernel.
# ----------------------------------------------------------------------------
def actor_kernel(x_ref, w1_ref, b1_ref, w2_ref, b2_ref, wh_ref, bh_ref,
                 eps_ref, scale_ref, shift_ref, out_ref, *,
                 act_dim, a_pad, deterministic, with_logprob):
    f32 = jnp.float32
    tb = out_ref.shape[0]

    # MLP trunk: bf16 MXU operands, f32 accumulation, f32 elementwise epilogue.
    h = jnp.dot(x_ref[...], w1_ref[...], preferred_element_type=f32) + b1_ref[...]
    h = jnp.maximum(h, 0.0)
    h = jnp.dot(h.astype(jnp.bfloat16), w2_ref[...],
                preferred_element_type=f32) + b2_ref[...]
    h = jnp.maximum(h, 0.0)

    # Fused heads: one matmul produces [mu | log_std] (each a_pad lanes wide).
    head = jnp.dot(h.astype(jnp.bfloat16), wh_ref[...],
                   preferred_element_type=f32) + bh_ref[...]
    mu = head[:, :a_pad]
    log_std = jnp.clip(head[:, a_pad:], LOG_STD_MIN, LOG_STD_MAX)
    std = jnp.exp(log_std)

    if deterministic:
        pi = mu
    else:
        eps = eps_ref[...]
        pi = mu + std * eps          # reparameterized sample

    # Tanh squash + action-space rescale.
    a = jnp.tanh(pi) * scale_ref[...] + shift_ref[...]

    # Lane mask over the (tb, a_pad) action block, reused below.
    lane = jax.lax.broadcasted_iota(jnp.int32, (tb, a_pad), 1)
    act_mask = lane < act_dim

    if with_logprob:
        # Normal(mu, std).log_prob(pi); z = (pi - mu)/std == eps exactly.
        if deterministic:
            gauss = -log_std - 0.5 * np.log(2.0 * np.pi)
        else:
            gauss = -0.5 * eps * eps - log_std - 0.5 * np.log(2.0 * np.pi)
        # Tanh correction 2*(log2 - pi - softplus(-2*pi)), numerically stable.
        u = -2.0 * pi
        softplus_u = jnp.maximum(u, 0.0) + jnp.log1p(jnp.exp(-jnp.abs(u)))
        corr = 2.0 * (np.log(2.0) - pi - softplus_u)
        # Mask padded action lanes; single fused cross-lane (XLU) reduction.
        logp = jnp.sum(jnp.where(act_mask, gauss - corr, 0.0),
                       axis=-1, keepdims=True)
    else:
        logp = jnp.zeros((tb, 1), f32)

    logp_b = jnp.broadcast_to(logp, (tb, a_pad))
    if out_ref.shape[1] == a_pad:
        # Pack action (lanes < act_dim) and log-prob (lanes >= act_dim) into a
        # single lane-dense slab -> one unmasked store, half the HBM writeback.
        out_ref[...] = jnp.where(act_mask, a, logp_b)
    else:
        # act_dim is a multiple of 128: no spare lanes, use the wide slab.
        out_ref[:, :a_pad] = a
        out_ref[:, a_pad:] = logp_b


# ----------------------------------------------------------------------------
# Host-side parameter packing: pad to (8,128) multiples, fuse heads, bf16 cast.
# ----------------------------------------------------------------------------
def pack_actor_params(params, act_dim):
    w1, b1 = params["w1"], params["b1"]
    w2, b2 = params["w2"], params["b2"]
    wmu, bmu = params["wmu"], params["bmu"]
    wls, bls = params["wls"], params["bls"]

    in_dim, h1 = w1.shape
    h2 = w2.shape[1]
    d_pad = _round_up(in_dim, _LANE)
    h1_pad = _round_up(h1, _LANE)
    h2_pad = _round_up(h2, _LANE)
    a_pad = _round_up(act_dim, _LANE)

    def pad2(w, r, c):
        return jnp.pad(w, ((0, r - w.shape[0]), (0, c - w.shape[1])))

    whead = jnp.concatenate(
        [pad2(wmu, h2_pad, a_pad), pad2(wls, h2_pad, a_pad)], axis=1)
    bhead = jnp.concatenate(
        [pad2(bmu, 1, a_pad), pad2(bls, 1, a_pad)], axis=1)

    packed = dict(
        w1=pad2(w1, d_pad, h1_pad).astype(jnp.bfloat16),
        b1=pad2(b1, 1, h1_pad).astype(jnp.float32),
        w2=pad2(w2, h1_pad, h2_pad).astype(jnp.bfloat16),
        b2=pad2(b2, 1, h2_pad).astype(jnp.float32),
        whead=whead.astype(jnp.bfloat16),
        bhead=bhead.astype(jnp.float32),
    )
    dims = dict(in_dim=in_dim, d_pad=d_pad, h1_pad=h1_pad, h2_pad=h2_pad,
                act_dim=act_dim, a_pad=a_pad)
    return packed, dims


# ----------------------------------------------------------------------------
# Wrapper: pad batch, build grid/BlockSpecs, call the kernel, slice outputs.
# ----------------------------------------------------------------------------
def squashed_gaussian_actor(final_obs, packed, dims, eps, act_scale, act_shift,
                            deterministic=False, with_logprob=True,
                            batch_tile=256):
    B = final_obs.shape[0]
    in_dim = dims["in_dim"]
    act_dim, a_pad, d_pad = dims["act_dim"], dims["a_pad"], dims["d_pad"]

    # Output slab: action + logp packed into a_pad lanes if there is a spare
    # lane (act_dim < a_pad), otherwise fall back to a wide slab.
    out_w = a_pad if act_dim < a_pad else a_pad + _LANE
    logp_lane = act_dim if act_dim < a_pad else a_pad

    # Batch tile: sublane multiple, capped at batch_tile; batch padded to tiles.
    tb = min(batch_tile, _round_up(B, _SUBLANE))
    b_pad = _round_up(B, tb)

    x = jnp.zeros((b_pad, d_pad), jnp.bfloat16)
    x = x.at[:B, :in_dim].set(final_obs.astype(jnp.bfloat16))
    scale_p = jnp.zeros((1, a_pad), jnp.float32).at[:, :act_dim].set(
        jnp.reshape(act_scale, (1, -1)))
    shift_p = jnp.zeros((1, a_pad), jnp.float32).at[:, :act_dim].set(
        jnp.reshape(act_shift, (1, -1)))

    batch_map = lambda i: (i, 0)     # tiles over the batch axis
    const_map = lambda i: (0, 0)     # weights/biases stay VMEM-resident

    if deterministic:
        # eps is never read in the deterministic path -> tiny dummy, no per-tile DMA.
        eps_p = jnp.zeros((1, a_pad), jnp.float32)
        eps_spec = pl.BlockSpec((1, a_pad), const_map)
    else:
        eps_p = jnp.zeros((b_pad, a_pad), jnp.float32).at[:B, :act_dim].set(eps)
        eps_spec = pl.BlockSpec((tb, a_pad), batch_map)

    inputs = (x, packed["w1"], packed["b1"], packed["w2"], packed["b2"],
              packed["whead"], packed["bhead"], eps_p, scale_p, shift_p)

    in_specs = [
        pl.BlockSpec((tb, d_pad), batch_map),                    # x
        pl.BlockSpec(packed["w1"].shape, const_map),
        pl.BlockSpec(packed["b1"].shape, const_map),
        pl.BlockSpec(packed["w2"].shape, const_map),
        pl.BlockSpec(packed["b2"].shape, const_map),
        pl.BlockSpec(packed["whead"].shape, const_map),
        pl.BlockSpec(packed["bhead"].shape, const_map),
        eps_spec,                                                # eps
        pl.BlockSpec((1, a_pad), const_map),                     # scale
        pl.BlockSpec((1, a_pad), const_map),                     # shift
    ]
    out_specs = pl.BlockSpec((tb, out_w), batch_map)

    flops = 2 * b_pad * (d_pad * dims["h1_pad"]
                         + dims["h1_pad"] * dims["h2_pad"]
                         + dims["h2_pad"] * 2 * a_pad)
    transcendentals = 4 * b_pad * a_pad   # exp, exp, log1p, tanh per element
    bytes_accessed = (sum(int(np.prod(a.shape)) * a.dtype.itemsize
                          for a in inputs)
                      + b_pad * out_w * 4)

    kernel = functools.partial(actor_kernel, act_dim=act_dim, a_pad=a_pad,
                               deterministic=deterministic,
                               with_logprob=with_logprob)

    out = pl.pallas_call(
        kernel,
        out_shape=jax.ShapeDtypeStruct((b_pad, out_w), jnp.float32),
        grid=(b_pad // tb,),
        in_specs=in_specs,
        out_specs=out_specs,
        compiler_params=pltpu.CompilerParams(
            dimension_semantics=("parallel",),
            vmem_limit_bytes=32 << 20),
        cost_estimate=pl.CostEstimate(flops=flops,
                                      transcendentals=transcendentals,
                                      bytes_accessed=bytes_accessed),
    )(*inputs)

    pi_action = out[:B, :act_dim]
    if with_logprob:
        logp_pi = out[:B, logp_lane]
    else:
        # Module quirk: with_logprob=False returns zeros_like(pi_action).
        logp_pi = jnp.zeros((B, act_dim), jnp.float32)
    return pi_action, logp_pi


# ----------------------------------------------------------------------------
# Pure-JAX reference (same padded/bf16 params -> same numerics) for checking.
# ----------------------------------------------------------------------------
def actor_reference(final_obs, packed, dims, eps, act_scale, act_shift):
    in_dim, d_pad = dims["in_dim"], dims["d_pad"]
    act_dim, a_pad = dims["act_dim"], dims["a_pad"]
    x = jnp.zeros((final_obs.shape[0], d_pad), jnp.bfloat16)
    x = x.at[:, :in_dim].set(final_obs.astype(jnp.bfloat16))
    h = jnp.dot(x, packed["w1"], preferred_element_type=jnp.float32) + packed["b1"]
    h = jnp.maximum(h, 0.0)
    h = jnp.dot(h.astype(jnp.bfloat16), packed["w2"],
                preferred_element_type=jnp.float32) + packed["b2"]
    h = jnp.maximum(h, 0.0)
    head = jnp.dot(h.astype(jnp.bfloat16), packed["whead"],
                   preferred_element_type=jnp.float32) + packed["bhead"]
    mu = head[:, :act_dim]
    log_std = jnp.clip(head[:, a_pad:a_pad + act_dim], LOG_STD_MIN, LOG_STD_MAX)
    std = jnp.exp(log_std)
    pi = mu + std * eps
    logp = jnp.sum(-0.5 * eps * eps - log_std - 0.5 * np.log(2.0 * np.pi), axis=-1)
    logp -= jnp.sum(2.0 * (np.log(2.0) - pi - jax.nn.softplus(-2.0 * pi)), axis=-1)
    a = (jnp.tanh(pi) * jnp.reshape(act_scale, (1, -1))
         + jnp.reshape(act_shift, (1, -1)))
    return a, logp


# ----------------------------------------------------------------------------
# Deterministic parameter construction (PyTorch Linear shapes, stored [in,out]).
# ----------------------------------------------------------------------------
def init_params(key, in_dim, hidden_sizes, act_dim):
    def linear(k, fan_in, fan_out):
        kw, kb = jax.random.split(k)
        bound = 1.0 / np.sqrt(fan_in)
        w = jax.random.uniform(kw, (fan_in, fan_out), jnp.float32, -bound, bound)
        b = jax.random.uniform(kb, (1, fan_out), jnp.float32, -bound, bound)
        return w, b

    k1, k2, k3, k4 = jax.random.split(key, 4)
    h1, h2 = hidden_sizes
    w1, b1 = linear(k1, in_dim, h1)
    w2, b2 = linear(k2, h1, h2)
    wmu, bmu = linear(k3, h2, act_dim)
    wls, bls = linear(k4, h2, act_dim)
    return dict(w1=w1, b1=b1, w2=w2, b2=b2, wmu=wmu, bmu=bmu, wls=wls, bls=bls)


if __name__ == "__main__":
    # Small shapes consistent with the module's forward.
    B, T, obs_dim = 2, 8, 8
    hidden_sizes = (32, 32)
    act_dim = 4
    history_indexes = [-3, -2, -1]
    in_dim = obs_dim * len(history_indexes)

    # Synthetic action-space bounds (act_space.high / act_space.low).
    act_high = np.linspace(0.5, 2.0, act_dim).astype(np.float32)
    act_low = -act_high
    act_scale = jnp.asarray((act_high - act_low) / 2.0)
    act_shift = jnp.asarray((act_high + act_low) / 2.0)

    key = jax.random.PRNGKey(0)
    k_obs, k_par, k_eps = jax.random.split(key, 3)

    obs_history = jax.random.normal(k_obs, (B, T, obs_dim), jnp.float32)
    params = init_params(k_par, in_dim, hidden_sizes, act_dim)
    eps = jax.random.normal(k_eps, (B, act_dim), jnp.float32)  # rsample noise

    packed, dims = pack_actor_params(params, act_dim)
    final_obs = build_obs_history(obs_history, history_indexes)  # [B, in_dim]

    # Stochastic path (deterministic=False, with_logprob=True).
    pi_action, logp_pi = squashed_gaussian_actor(
        final_obs, packed, dims, eps, act_scale, act_shift,
        deterministic=False, with_logprob=True)
    jax.block_until_ready((pi_action, logp_pi))
    assert pi_action.shape == (B, act_dim)
    assert logp_pi.shape == (B,)

    # Check against a plain-JAX reference using the same packed params.
    ref_a, ref_lp = actor_reference(final_obs, packed, dims, eps,
                                    act_scale, act_shift)
    np.testing.assert_allclose(np.asarray(pi_action), np.asarray(ref_a),
                               rtol=2e-2, atol=2e-2)
    np.testing.assert_allclose(np.asarray(logp_pi), np.asarray(ref_lp),
                               rtol=2e-2, atol=2e-2)

    # Deterministic path: sampling math is compiled out (pi = mu); must match
    # the reference evaluated at eps = 0.
    det_a, det_lp = squashed_gaussian_actor(
        final_obs, packed, dims, eps, act_scale, act_shift,
        deterministic=True, with_logprob=True)
    jax.block_until_ready((det_a, det_lp))
    ref_da, ref_dlp = actor_reference(final_obs, packed, dims,
                                      jnp.zeros_like(eps), act_scale, act_shift)
    np.testing.assert_allclose(np.asarray(det_a), np.asarray(ref_da),
                               rtol=2e-2, atol=2e-2)
    np.testing.assert_allclose(np.asarray(det_lp), np.asarray(ref_dlp),
                               rtol=2e-2, atol=2e-2)

    # with_logprob=False path: log-prob math compiled out, zeros returned.
    nol_a, nol_lp = squashed_gaussian_actor(
        final_obs, packed, dims, eps, act_scale, act_shift,
        deterministic=False, with_logprob=False)
    jax.block_until_ready((nol_a, nol_lp))
    assert nol_a.shape == (B, act_dim)
    assert nol_lp.shape == (B, act_dim)
    np.testing.assert_allclose(np.asarray(nol_a), np.asarray(ref_a),
                               rtol=2e-2, atol=2e-2)

    print("KERNEL_OK")
</pallas_src>

<mosaic_0001>
module attributes {stable_mosaic.version = 11 : i64} {
  func.func @actor_kernel(%arg0: i32, %arg1: memref<8x128xbf16, #tpu.memory_space<vmem>>, %arg2: memref<128x128xbf16, #tpu.memory_space<vmem>>, %arg3: memref<1x128xf32, #tpu.memory_space<vmem>>, %arg4: memref<128x128xbf16, #tpu.memory_space<vmem>>, %arg5: memref<1x128xf32, #tpu.memory_space<vmem>>, %arg6: memref<128x256xbf16, #tpu.memory_space<vmem>>, %arg7: memref<1x256xf32, #tpu.memory_space<vmem>>, %arg8: memref<8x128xf32, #tpu.memory_space<vmem>>, %arg9: memref<1x128xf32, #tpu.memory_space<vmem>>, %arg10: memref<1x128xf32, #tpu.memory_space<vmem>>, %arg11: memref<8x128xf32, #tpu.memory_space<vmem>>) attributes {dimension_semantics = [#tpu.dimension_semantics<parallel>], iteration_bounds = array<i64: 1>, scalar_prefetch = 0 : i64, scratch_operands = 0 : i64, tpu.core_type = #tpu.core_type<tc>, window_params = [{transform_indices = @transform_0, window_bounds = array<i64: 8, 128>}, {pipeline_mode = #tpu.pipeline_mode<synchronous>, transform_indices = @transform_1, window_bounds = array<i64: 128, 128>}, {pipeline_mode = #tpu.pipeline_mode<synchronous>, transform_indices = @transform_2, window_bounds = array<i64: 1, 128>}, {pipeline_mode = #tpu.pipeline_mode<synchronous>, transform_indices = @transform_3, window_bounds = array<i64: 128, 128>}, {pipeline_mode = #tpu.pipeline_mode<synchronous>, transform_indices = @transform_4, window_bounds = array<i64: 1, 128>}, {pipeline_mode = #tpu.pipeline_mode<synchronous>, transform_indices = @transform_5, window_bounds = array<i64: 128, 256>}, {pipeline_mode = #tpu.pipeline_mode<synchronous>, transform_indices = @transform_6, window_bounds = array<i64: 1, 256>}, {transform_indices = @transform_7, window_bounds = array<i64: 8, 128>}, {pipeline_mode = #tpu.pipeline_mode<synchronous>, transform_indices = @transform_8, window_bounds = array<i64: 1, 128>}, {pipeline_mode = #tpu.pipeline_mode<synchronous>, transform_indices = @transform_9, window_bounds = array<i64: 1, 128>}, {transform_indices = @transform_10, window_bounds = array<i64: 8, 128>}]} {
    %c0 = arith.constant 0 : index
    %c0_0 = arith.constant 0 : index
    %0 = vector.load %arg1[%c0, %c0_0] : memref<8x128xbf16, #tpu.memory_space<vmem>>, vector<8x128xbf16>
    %c0_1 = arith.constant 0 : index
    %c0_2 = arith.constant 0 : index
    %1 = vector.load %arg2[%c0_1, %c0_2] : memref<128x128xbf16, #tpu.memory_space<vmem>>, vector<128x128xbf16>
    %cst = arith.constant dense<0.000000e+00> : vector<8x128xf32>
    %2 = tpu.matmul %0, %1, %cst {dimension_numbers = #tpu.dot_dimension_numbers<[1], [0], [0], [1], [0, 0, 1, 1], [], []>} : vector<8x128xbf16>, vector<128x128xbf16>, vector<8x128xf32> -> vector<8x128xf32>
    %c0_3 = arith.constant 0 : index
    %c0_4 = arith.constant 0 : index
    %3 = vector.load %arg3[%c0_3, %c0_4] : memref<1x128xf32, #tpu.memory_space<vmem>>, vector<1x128xf32>
    %4 = vector.broadcast %3 : vector<1x128xf32> to vector<8x128xf32>
    %5 = arith.addf %2, %4 : vector<8x128xf32>
    %cst_5 = arith.constant 0.000000e+00 : f32
    %6 = vector.broadcast %cst_5 : f32 to vector<8x128xf32>
    %7 = arith.maximumf %5, %6 : vector<8x128xf32>
    %8 = arith.truncf %7 : vector<8x128xf32> to vector<8x128xbf16>
    %c0_6 = arith.constant 0 : index
    %c0_7 = arith.constant 0 : index
    %9 = vector.load %arg4[%c0_6, %c0_7] : memref<128x128xbf16, #tpu.memory_space<vmem>>, vector<128x128xbf16>
    %cst_8 = arith.constant dense<0.000000e+00> : vector<8x128xf32>
    %10 = tpu.matmul %8, %9, %cst_8 {dimension_numbers = #tpu.dot_dimension_numbers<[1], [0], [0], [1], [0, 0, 1, 1], [], []>} : vector<8x128xbf16>, vector<128x128xbf16>, vector<8x128xf32> -> vector<8x128xf32>
    %c0_9 = arith.constant 0 : index
    %c0_10 = arith.constant 0 : index
    %11 = vector.load %arg5[%c0_9, %c0_10] : memref<1x128xf32, #tpu.memory_space<vmem>>, vector<1x128xf32>
    %12 = vector.broadcast %11 : vector<1x128xf32> to vector<8x128xf32>
    %13 = arith.addf %10, %12 : vector<8x128xf32>
    %cst_11 = arith.constant 0.000000e+00 : f32
    %14 = vector.broadcast %cst_11 : f32 to vector<8x128xf32>
    %15 = arith.maximumf %13, %14 : vector<8x128xf32>
    %16 = arith.truncf %15 : vector<8x128xf32> to vector<8x128xbf16>
    %c0_12 = arith.constant 0 : index
    %c0_13 = arith.constant 0 : index
    %17 = vector.load %arg6[%c0_12, %c0_13] : memref<128x256xbf16, #tpu.memory_space<vmem>>, vector<128x256xbf16>
    %cst_14 = arith.constant dense<0.000000e+00> : vector<8x256xf32>
    %18 = tpu.matmul %16, %17, %cst_14 {dimension_numbers = #tpu.dot_dimension_numbers<[1], [0], [0], [1], [0, 0, 1, 1], [], []>} : vector<8x128xbf16>, vector<128x256xbf16>, vector<8x256xf32> -> vector<8x256xf32>
    %c0_15 = arith.constant 0 : index
    %c0_16 = arith.constant 0 : index
    %19 = vector.load %arg7[%c0_15, %c0_16] : memref<1x256xf32, #tpu.memory_space<vmem>>, vector<1x256xf32>
    %20 = vector.broadcast %19 : vector<1x256xf32> to vector<8x256xf32>
    %21 = arith.addf %18, %20 : vector<8x256xf32>
    %22 = vector.extract_strided_slice %21 {offsets = [0, 0], sizes = [8, 128], strides = [1, 1]} : vector<8x256xf32> to vector<8x128xf32>
    %23 = vector.extract_strided_slice %21 {offsets = [0, 128], sizes = [8, 128], strides = [1, 1]} : vector<8x256xf32> to vector<8x128xf32>
    %cst_17 = arith.constant -2.000000e+01 : f32
    %cst_18 = arith.constant 2.000000e+00 : f32
    %24 = vector.broadcast %cst_17 : f32 to vector<8x128xf32>
    %25 = arith.maximumf %24, %23 : vector<8x128xf32>
    %26 = vector.broadcast %cst_18 : f32 to vector<8x128xf32>
    %27 = arith.minimumf %26, %25 : vector<8x128xf32>
    %28 = math.exp %27 : vector<8x128xf32>
    %c0_19 = arith.constant 0 : index
    %c0_20 = arith.constant 0 : index
    %29 = vector.load %arg8[%c0_19, %c0_20] : memref<8x128xf32, #tpu.memory_space<vmem>>, vector<8x128xf32>
    %30 = arith.mulf %28, %29 : vector<8x128xf32>
    %31 = arith.addf %22, %30 : vector<8x128xf32>
    %32 = math.tanh %31 : vector<8x128xf32>
    %c0_21 = arith.constant 0 : index
    %c0_22 = arith.constant 0 : index
    %33 = vector.load %arg9[%c0_21, %c0_22] : memref<1x128xf32, #tpu.memory_space<vmem>>, vector<1x128xf32>
    %34 = vector.broadcast %33 : vector<1x128xf32> to vector<8x128xf32>
    %35 = arith.mulf %32, %34 : vector<8x128xf32>
    %c0_23 = arith.constant 0 : index
    %c0_24 = arith.constant 0 : index
    %36 = vector.load %arg10[%c0_23, %c0_24] : memref<1x128xf32, #tpu.memory_space<vmem>>, vector<1x128xf32>
    %37 = vector.broadcast %36 : vector<1x128xf32> to vector<8x128xf32>
    %38 = arith.addf %35, %37 : vector<8x128xf32>
    %39 = tpu.iota {dimensions = array<i32: 1>} : vector<8x128xi32>
    %c4_i32 = arith.constant 4 : i32
    %40 = vector.broadcast %c4_i32 : i32 to vector<8x128xi32>
    %41 = arith.cmpi slt, %39, %40 : vector<8x128xi32>
    %cst_25 = arith.constant -5.000000e-01 : f32
    %42 = vector.broadcast %cst_25 : f32 to vector<8x128xf32>
    %43 = arith.mulf %42, %29 : vector<8x128xf32>
    %44 = arith.mulf %43, %29 : vector<8x128xf32>
    %45 = arith.subf %44, %27 : vector<8x128xf32>
    %cst_26 = arith.constant 0.918938517 : f32
    %46 = vector.broadcast %cst_26 : f32 to vector<8x128xf32>
    %47 = arith.subf %45, %46 : vector<8x128xf32>
    %cst_27 = arith.constant -2.000000e+00 : f32
    %48 = vector.broadcast %cst_27 : f32 to vector<8x128xf32>
    %49 = arith.mulf %48, %31 : vector<8x128xf32>
    %cst_28 = arith.constant 0.000000e+00 : f32
    %50 = vector.broadcast %cst_28 : f32 to vector<8x128xf32>
    %51 = arith.maximumf %49, %50 : vector<8x128xf32>
    %52 = math.absf %49 : vector<8x128xf32>
    %cst_29 = arith.constant 0.000000e+00 : f32
    %53 = vector.broadcast %cst_29 : f32 to vector<8x128xf32>
    %54 = arith.subf %53, %52 : vector<8x128xf32>
    %55 = math.exp %54 : vector<8x128xf32>
    %56 = math.log1p %55 : vector<8x128xf32>
    %57 = arith.addf %51, %56 : vector<8x128xf32>
    %cst_30 = arith.constant 0.693147182 : f32
    %58 = vector.broadcast %cst_30 : f32 to vector<8x128xf32>
    %59 = arith.subf %58, %31 : vector<8x128xf32>
    %60 = arith.subf %59, %57 : vector<8x128xf32>
    %cst_31 = arith.constant 2.000000e+00 : f32
    %61 = vector.broadcast %cst_31 : f32 to vector<8x128xf32>
    %62 = arith.mulf %61, %60 : vector<8x128xf32>
    %63 = arith.subf %47, %62 : vector<8x128xf32>
    %cst_32 = arith.constant 0.000000e+00 : f32
    %64 = vector.broadcast %cst_32 : f32 to vector<8x128xf32>
    %65 = arith.select %41, %63, %64 : vector<8x128xi1>, vector<8x128xf32>
    %cst_33 = arith.constant dense<0.000000e+00> : vector<8xf32>
    %66 = vector.multi_reduction <add>, %65, %cst_33 [1] : vector<8x128xf32> to vector<8xf32>
    %67 = vector.shape_cast %66 : vector<8xf32> to vector<8x1xf32>
    %68 = vector.shape_cast %67 : vector<8x1xf32> to vector<8x1xf32>
    %69 = vector.broadcast %68 : vector<8x1xf32> to vector<8x128xf32>
    %70 = arith.select %41, %38, %69 : vector<8x128xi1>, vector<8x128xf32>
    %c0_34 = arith.constant 0 : index
    %c0_35 = arith.constant 0 : index
    %71 = vector.load %arg11[%c0_34, %c0_35] : memref<8x128xf32, #tpu.memory_space<vmem>>, vector<8x128xf32>
    tpu.vector_store %arg11[%c0_34, %c0_35], %70 {strides = array<i32>} : memref<8x128xf32, #tpu.memory_space<vmem>>, vector<8x128xf32>,
    return
  }
  func.func @transform_0(%arg0: i32) -> (i32, i32) {
    %c0_i32 = arith.constant 0 : i32
    %c0_i32_0 = arith.constant 0 : i32
    return %arg0, %c0_i32 : i32, i32
  }
  func.func @transform_1(%arg0: i32) -> (i32, i32) {
    %c0_i32 = arith.constant 0 : i32
    %c0_i32_0 = arith.constant 0 : i32
    %c0_i32_1 = arith.constant 0 : i32
    return %c0_i32, %c0_i32_0 : i32, i32
  }
  func.func @transform_2(%arg0: i32) -> (i32, i32) {
    %c0_i32 = arith.constant 0 : i32
    %c0_i32_0 = arith.constant 0 : i32
    %c0_i32_1 = arith.constant 0 : i32
    return %c0_i32, %c0_i32_0 : i32, i32
  }
  func.func @transform_3(%arg0: i32) -> (i32, i32) {
    %c0_i32 = arith.constant 0 : i32
    %c0_i32_0 = arith.constant 0 : i32
    %c0_i32_1 = arith.constant 0 : i32
    return %c0_i32, %c0_i32_0 : i32, i32
  }
  func.func @transform_4(%arg0: i32) -> (i32, i32) {
    %c0_i32 = arith.constant 0 : i32
    %c0_i32_0 = arith.constant 0 : i32
    %c0_i32_1 = arith.constant 0 : i32
    return %c0_i32, %c0_i32_0 : i32, i32
  }
  func.func @transform_5(%arg0: i32) -> (i32, i32) {
    %c0_i32 = arith.constant 0 : i32
    %c0_i32_0 = arith.constant 0 : i32
    %c0_i32_1 = arith.constant 0 : i32
    return %c0_i32, %c0_i32_0 : i32, i32
  }
  func.func @transform_6(%arg0: i32) -> (i32, i32) {
    %c0_i32 = arith.constant 0 : i32
    %c0_i32_0 = arith.constant 0 : i32
    %c0_i32_1 = arith.constant 0 : i32
    return %c0_i32, %c0_i32_0 : i32, i32
  }
  func.func @transform_7(%arg0: i32) -> (i32, i32) {
    %c0_i32 = arith.constant 0 : i32
    %c0_i32_0 = arith.constant 0 : i32
    return %arg0, %c0_i32 : i32, i32
  }
  func.func @transform_8(%arg0: i32) -> (i32, i32) {
    %c0_i32 = arith.constant 0 : i32
    %c0_i32_0 = arith.constant 0 : i32
    %c0_i32_1 = arith.constant 0 : i32
    return %c0_i32, %c0_i32_0 : i32, i32
  }
  func.func @transform_9(%arg0: i32) -> (i32, i32) {
    %c0_i32 = arith.constant 0 : i32
    %c0_i32_0 = arith.constant 0 : i32
    %c0_i32_1 = arith.constant 0 : i32
    return %c0_i32, %c0_i32_0 : i32, i32
  }
  func.func @transform_10(%arg0: i32) -> (i32, i32) {
    %c0_i32 = arith.constant 0 : i32
    %c0_i32_0 = arith.constant 0 : i32
    return %arg0, %c0_i32 : i32, i32
  }
}

</mosaic_0001>

<llo_original>
// kernel: tpu_custom_call.1
$region0: #{tpu_custom_call.1}
  #allocation0 [shape = 'u32[]', space=smem, size = 0x4, offset = 0x4, fixed_abs, tag = 'smem constant byte address 0x4 - core index']
  #allocation1 [shape = 'u32[144,128]{1,0:T(1,128)}', space=vmem, size = 0x12000, scoped, tag = 'internal scratch']
  %s0 = inlined_call_operand.hbm [shape: bf16[8,128], index: 0, kind: input, shape index: {}]
  %s1 = inlined_call_operand.hbm [shape: bf16[128,128], index: 1, kind: input, shape index: {}]
  %s2 = inlined_call_operand.vmem [shape: f32[1,128], index: 2, kind: input, shape index: {}]
  %s3 = inlined_call_operand.hbm [shape: bf16[128,128], index: 3, kind: input, shape index: {}]
  %s4 = inlined_call_operand.vmem [shape: f32[1,128], index: 4, kind: input, shape index: {}]
  %s5 = inlined_call_operand.hbm [shape: bf16[128,256], index: 5, kind: input, shape index: {}]
  %s6 = inlined_call_operand.vmem [shape: f32[1,256], index: 6, kind: input, shape index: {}]
  %s7 = inlined_call_operand.vmem [shape: f32[8,128], index: 7, kind: input, shape index: {}]
  %s8 = inlined_call_operand.vmem [shape: f32[1,128], index: 8, kind: input, shape index: {}]
  %s9 = inlined_call_operand.vmem [shape: f32[1,128], index: 9, kind: input, shape index: {}]
  %s10 = inlined_call_operand.hbm [shape: f32[8,128], index: 10, kind: output, shape index: {}]
  %s11 = sld [smem:[#allocation0]]
  $region66: #{tpu_custom_call.1} parent=0
    _
  %s13 = ssub.s32 1, %s11
  %s14 = scalar_select 0, %s13, %s11
  $region1: #{tpu_custom_call.1} parent=0
    #allocation2 [shape = 'u8[2048]{0}', space=vmem, size = 0x800, scoped, tag = 'input window, operand 0, single buffered']
    #allocation3 [shape = 's32[1]{0}', space=sflag, size = 0x4, scoped, tag = 'scoped memory for tpu_custom_call.1']
    #allocation4 [shape = 's32[1]{0}', space=sflag, size = 0x4, scoped, tag = 'scoped memory for tpu_custom_call.1']
    #allocation5 [shape = 'u8[32768]{0}', space=vmem, size = 0x8000, scoped, tag = 'input window, operand 1, single buffered']
    #allocation6 [shape = 's32[1]{0}', space=sflag, size = 0x4, scoped, tag = 'scoped memory for tpu_custom_call.1']
    #allocation7 [shape = 'u8[32768]{0}', space=vmem, size = 0x8000, scoped, tag = 'input window, operand 3, single buffered']
    #allocation8 [shape = 'u8[65536]{0}', space=vmem, size = 0x10000, scoped, tag = 'input window, operand 5, single buffered']
    #allocation9 [shape = 's32[1]{0}', space=sflag, size = 0x4, scoped, tag = 'scoped memory for tpu_custom_call.1']
    #allocation10 [shape = 'u8[4096]{0}', space=vmem, size = 0x1000, scoped, tag = 'output window, operand 0, single buffered']
    %15 = vsyncpa [#allocation3], 0
    %16 = vsyncpa [#allocation6], 0
    %17 = vsyncpa [#allocation9], 0
    %18 = vsyncpa [#allocation4], 0
    // Predicated region
    $region2: #{tpu_custom_call.1} parent=1 // pred_check
      _
    $region3: #{tpu_custom_call.1} parent=1 // pred_check_branch
      %20 = sbr.rel (0) target = $region5
    $region4: #{tpu_custom_call.1} parent=1 // pred_region
      %s22 = ssub.s32 64, 64
      %23 = vsyncadd [#allocation3], %s22
      %s25 = sshll.u32 [#allocation2], 4
      %s26 = int_to_ptr.vmem [resolvable:$true] %s25
      %28 = dma.hbm_to_vmem [thread:$0]  %s0, 64, %s26, [#allocation3]
    $region5: #{tpu_custom_call.1} parent=1 // pred_fallthru
      _
    // Predicated region
    $region6: #{tpu_custom_call.1} parent=1 // pred_check
      _
    $region7: #{tpu_custom_call.1} parent=1 // pred_check_branch
      %30 = sbr.rel (0) target = $region9
    $region8: #{tpu_custom_call.1} parent=1 // pred_region
      %s32 = ssub.s32 1024, 1024
      %33 = vsyncadd [#allocation6], %s32
      %s34 = sshll.u32 [#allocation5], 4
      %s35 = int_to_ptr.vmem [resolvable:$true] %s34
      %40 = dma.hbm_to_vmem [thread:$0]  %s1, 1024, %s35, [#allocation6], 64, 64, 4
    $region9: #{tpu_custom_call.1} parent=1 // pred_fallthru
      _
    // Predicated region
    $region10: #{tpu_custom_call.1} parent=1 // pred_check
      _
    $region11: #{tpu_custom_call.1} parent=1 // pred_check_branch
      %42 = sbr.rel (0) target = $region13
    $region12: #{tpu_custom_call.1} parent=1 // pred_region
      _
    $region13: #{tpu_custom_call.1} parent=1 // pred_fallthru
      _
    // Predicated region
    $region14: #{tpu_custom_call.1} parent=1 // pred_check
      _
    $region15: #{tpu_custom_call.1} parent=1 // pred_check_branch
      %44 = sbr.rel (0) target = $region17
    $region16: #{tpu_custom_call.1} parent=1 // pred_region
      %s46 = ssub.s32 1024, 1024
      %47 = vsyncadd [#allocation6], %s46
      %s48 = sshll.u32 [#allocation7], 4
      %s49 = int_to_ptr.vmem [resolvable:$true] %s48
      %54 = dma.hbm_to_vmem [thread:$0]  %s3, 1024, %s49, [#allocation6], 64, 64, 4
    $region17: #{tpu_custom_call.1} parent=1 // pred_fallthru
      _
    // Predicated region
    $region18: #{tpu_custom_call.1} parent=1 // pred_check
      _
    $region19: #{tpu_custom_call.1} parent=1 // pred_check_branch
      %56 = sbr.rel (0) target = $region21
    $region20: #{tpu_custom_call.1} parent=1 // pred_region
      _
    $region21: #{tpu_custom_call.1} parent=1 // pred_fallthru
      _
    // Predicated region
    $region22: #{tpu_custom_call.1} parent=1 // pred_check
      _
    $region23: #{tpu_custom_call.1} parent=1 // pred_check_branch
      %58 = sbr.rel (0) target = $region25
    $region24: #{tpu_custom_call.1} parent=1 // pred_region
      %s60 = ssub.s32 2048, 2048
      %61 = vsyncadd [#allocation9], %s60
      %s62 = sshll.u32 [#allocation8], 4
      %s63 = int_to_ptr.vmem [resolvable:$true] %s62
      %68 = dma.hbm_to_vmem [thread:$0]  %s5, 2048, %s63, [#allocation9], 128, 128, 8
    $region25: #{tpu_custom_call.1} parent=1 // pred_fallthru
      _
    // Predicated region
    $region26: #{tpu_custom_call.1} parent=1 // pred_check
      _
    $region27: #{tpu_custom_call.1} parent=1 // pred_check_branch
      %70 = sbr.rel (0) target = $region29
    $region28: #{tpu_custom_call.1} parent=1 // pred_region
      _
    $region29: #{tpu_custom_call.1} parent=1 // pred_fallthru
      _
    // Predicated region
    $region30: #{tpu_custom_call.1} parent=1 // pred_check
      _
    $region31: #{tpu_custom_call.1} parent=1 // pred_check_branch
      %72 = sbr.rel (0) target = $region33
    $region32: #{tpu_custom_call.1} parent=1 // pred_region
      _
    $region33: #{tpu_custom_call.1} parent=1 // pred_fallthru
      _
    // Predicated region
    $region34: #{tpu_custom_call.1} parent=1 // pred_check
      _
    $region35: #{tpu_custom_call.1} parent=1 // pred_check_branch
      %74 = sbr.rel (0) target = $region37
    $region36: #{tpu_custom_call.1} parent=1 // pred_region
      _
    $region37: #{tpu_custom_call.1} parent=1 // pred_fallthru
      _
    // Predicated region
    $region38: #{tpu_custom_call.1} parent=1 // pred_check
      _
    $region39: #{tpu_custom_call.1} parent=1 // pred_check_branch
      %76 = sbr.rel (0) target = $region41
    $region40: #{tpu_custom_call.1} parent=1 // pred_region
      _
    $region41: #{tpu_custom_call.1} parent=1 // pred_fallthru
      _
    // Predicated region
    $region42: #{tpu_custom_call.1} parent=1 // pred_check
      _
    $region43: #{tpu_custom_call.1} parent=1 // pred_check_branch
      %78 = sbr.rel (0) target = $region45
    $region44: #{tpu_custom_call.1} parent=1 // pred_region
      %79 = dma.done [#allocation3], 64
    $region45: #{tpu_custom_call.1} parent=1 // pred_fallthru
      _
    // Predicated region
    $region46: #{tpu_custom_call.1} parent=1 // pred_check
      _
    $region47: #{tpu_custom_call.1} parent=1 // pred_check_branch
      %81 = sbr.rel (0) target = $region49
    $region48: #{tpu_custom_call.1} parent=1 // pred_region
      %82 = dma.done [#allocation6], 1024
    $region49: #{tpu_custom_call.1} parent=1 // pred_fallthru
      _
    // Predicated region
    $region50: #{tpu_custom_call.1} parent=1 // pred_check
      _
    $region51: #{tpu_custom_call.1} parent=1 // pred_check_branch
      %84 = sbr.rel (0) target = $region53
    $region52: #{tpu_custom_call.1} parent=1 // pred_region
      %85 = dma.done [#allocation6], 1024
    $region53: #{tpu_custom_call.1} parent=1 // pred_fallthru
      _
    // Predicated region
    $region54: #{tpu_custom_call.1} parent=1 // pred_check
      _
    $region55: #{tpu_custom_call.1} parent=1 // pred_check_branch
      %87 = sbr.rel (0) target = $region57
    $region56: #{tpu_custom_call.1} parent=1 // pred_region
      %88 = dma.done [#allocation9], 2048
    $region57: #{tpu_custom_call.1} parent=1 // pred_fallthru
      _
    %v90 = vld [vmem:[#allocation2] sm:$0xf]
    %v91 = vld [vmem:[#allocation5] sm:$0xf]
    %v92 = vld [vmem:[#allocation5 + $0x4] sm:$0xf]
    %v93 = vld [vmem:[#allocation5 + $0x8] sm:$0xf]
    %v94 = vld [vmem:[#allocation5 + $0xc] sm:$0xf]
    %v95 = vld [vmem:[#allocation5 + $0x10] sm:$0xf]
    %v96 = vld [vmem:[#allocation5 + $0x14] sm:$0xf]
    %v97 = vld [vmem:[#allocation5 + $0x18] sm:$0xf]
    %v98 = vld [vmem:[#allocation5 + $0x1c] sm:$0xf]
    %v99 = vld [vmem:[#allocation5 + $0x20] sm:$0xf]
    %v100 = vld [vmem:[#allocation5 + $0x24] sm:$0xf]
    %v101 = vld [vmem:[#allocation5 + $0x28] sm:$0xf]
    %v102 = vld [vmem:[#allocation5 + $0x2c] sm:$0xf]
    %v103 = vld [vmem:[#allocation5 + $0x30] sm:$0xf]
    %v104 = vld [vmem:[#allocation5 + $0x34] sm:$0xf]
    %v105 = vld [vmem:[#allocation5 + $0x38] sm:$0xf]
    %v106 = vld [vmem:[#allocation5 + $0x3c] sm:$0xf]
    %v107 = vld [vmem:[%s2] sm:$0x1]
    %v109 = vlaneseq
    %v110 = vshrl.u32 %v109, 7
    %v111 = vsub.s32 0, %v110
    %v112 = vrot.slane %v107, %v111
    %v130 = vunpack.c.l.b16 %v91
    %v131 = vunpack.c.l.b16 %v92
    %v132 = vunpack.c.l.b16 %v93
    %v133 = vunpack.c.l.b16 %v94
    %v134 = vunpack.c.l.b16 %v95
    %v135 = vunpack.c.l.b16 %v96
    %v136 = vunpack.c.l.b16 %v97
    %v137 = vunpack.c.l.b16 %v98
    %v138 = vunpack.c.l.b16 %v99
    %v139 = vunpack.c.l.b16 %v100
    %v140 = vunpack.c.l.b16 %v101
    %v141 = vunpack.c.l.b16 %v102
    %v142 = vunpack.c.l.b16 %v103
    %v143 = vunpack.c.l.b16 %v104
    %v144 = vunpack.c.l.b16 %v105
    %v145 = vunpack.c.l.b16 %v106
    %v146 = vpack.c.b16 %v131, %v130
    %v147 = vpack.c.b16 %v133, %v132
    %v148 = vpack.c.b16 %v135, %v134
    %v149 = vpack.c.b16 %v137, %v136
    %v150 = vpack.c.b16 %v139, %v138
    %v151 = vpack.c.b16 %v141, %v140
    %v152 = vpack.c.b16 %v143, %v142
    %v153 = vpack.c.b16 %v145, %v144
    %162 = vmatprep.subr.bf16.mxu0 0
    %163 = vmatpush1.bf16.msra.mxu0 %v153
    %164 = vmatprep.subr.bf16.mxu0 0
    %165 = vmatpush1.bf16.msra.mxu0 %v152
    %166 = vmatprep.subr.bf16.mxu0 0
    %167 = vmatpush1.bf16.msra.mxu0 %v151
    %168 = vmatprep.subr.bf16.mxu0 0
    %169 = vmatpush1.bf16.msra.mxu0 %v150
    %170 = vmatprep.subr.bf16.mxu0 0
    %171 = vmatpush1.bf16.msra.mxu0 %v149
    %172 = vmatprep.subr.bf16.mxu0 0
    %173 = vmatpush1.bf16.msra.mxu0 %v148
    %174 = vmatprep.subr.bf16.mxu0 0
    %175 = vmatpush1.bf16.msra.mxu0 %v147
    %176 = vmatprep.subr.bf16.mxu0 0
    %177 = vmatpush1.bf16.msra.mxu0 %v146
    %178 = vmatprep.subr.bf16.mxu0 0
    %179 = vmatpush2.bf16.msra.mxu0 0
    %180 = vmatprep.subr.bf16.mxu0 0
    %181 = vmatpush2.bf16.msra.mxu0 0
    %182 = vmatprep.subr.bf16.mxu0 0
    %183 = vmatpush2.bf16.msra.mxu0 0
    %184 = vmatprep.subr.bf16.mxu0 0
    %185 = vmatpush2.bf16.msra.mxu0 0
    %186 = vmatprep.subr.bf16.mxu0 0
    %187 = vmatpush2.bf16.msra.mxu0 0
    %188 = vmatprep.subr.bf16.mxu0 0
    %189 = vmatpush2.bf16.msra.mxu0 0
    %190 = vmatprep.subr.bf16.mxu0 0
    %191 = vmatpush2.bf16.msra.mxu0 0
    %192 = vmatprep.subr.bf16.mxu0 0
    %193 = vmatpush2.bf16.msra.mxu0 0
    %194 = vmatprep.mubr.bf16.mxu0 0
    %195 = vmatmul.mubr.bf16.gmra.mxu0 %v90
    %v196 = vpop.f32.mrf.mxu0
    %v197 = vadd.f32 %v112, %v196
    %v198 = vpop.f32.mrf.mxu0
    %v199 = vpop.f32.mrf.mxu0
    %v200 = vpop.f32.mrf.mxu0
    %201 = vdwg.mxu0
    %v202 = vmax.f32 %v197, 0.0
    %v203 = vpack.c.bf16 %v202, %v202
    %v204 = vld [vmem:[#allocation7] sm:$0xf]
    %v205 = vld [vmem:[#allocation7 + $0x4] sm:$0xf]
    %v206 = vld [vmem:[#allocation7 + $0x8] sm:$0xf]
    %v207 = vld [vmem:[#allocation7 + $0xc] sm:$0xf]
    %v208 = vld [vmem:[#allocation7 + $0x10] sm:$0xf]
    %v209 = vld [vmem:[#allocation7 + $0x14] sm:$0xf]
    %v210 = vld [vmem:[#allocation7 + $0x18] sm:$0xf]
    %v211 = vld [vmem:[#allocation7 + $0x1c] sm:$0xf]
    %v212 = vld [vmem:[#allocation7 + $0x20] sm:$0xf]
    %v213 = vld [vmem:[#allocation7 + $0x24] sm:$0xf]
    %v214 = vld [vmem:[#allocation7 + $0x28] sm:$0xf]
    %v215 = vld [vmem:[#allocation7 + $0x2c] sm:$0xf]
    %v216 = vld [vmem:[#allocation7 + $0x30] sm:$0xf]
    %v217 = vld [vmem:[#allocation7 + $0x34] sm:$0xf]
    %v218 = vld [vmem:[#allocation7 + $0x38] sm:$0xf]
    %v219 = vld [vmem:[#allocation7 + $0x3c] sm:$0xf]
    %v220 = vld [vmem:[%s4] sm:$0x1]
    %v222 = vlaneseq
    %v223 = vshrl.u32 %v222, 7
    %v224 = vsub.s32 0, %v223
    %v225 = vrot.slane %v220, %v224
    %v243 = vunpack.c.l.b16 %v204
    %v244 = vunpack.c.l.b16 %v205
    %v245 = vunpack.c.l.b16 %v206
    %v246 = vunpack.c.l.b16 %v207
    %v247 = vunpack.c.l.b16 %v208
    %v248 = vunpack.c.l.b16 %v209
    %v249 = vunpack.c.l.b16 %v210
    %v250 = vunpack.c.l.b16 %v211
    %v251 = vunpack.c.l.b16 %v212
    %v252 = vunpack.c.l.b16 %v213
    %v253 = vunpack.c.l.b16 %v214
    %v254 = vunpack.c.l.b16 %v215
    %v255 = vunpack.c.l.b16 %v216
    %v256 = vunpack.c.l.b16 %v217
    %v257 = vunpack.c.l.b16 %v218
    %v258 = vunpack.c.l.b16 %v219
    %v259 = vpack.c.b16 %v244, %v243
    %v260 = vpack.c.b16 %v246, %v245
    %v261 = vpack.c.b16 %v248, %v247
    %v262 = vpack.c.b16 %v250, %v249
    %v263 = vpack.c.b16 %v252, %v251
    %v264 = vpack.c.b16 %v254, %v253
    %v265 = vpack.c.b16 %v256, %v255
    %v266 = vpack.c.b16 %v258, %v257
    %275 = vmatprep.subr.bf16.mxu0 0
    %276 = vmatpush1.bf16.msra.mxu0 %v266
    %277 = vmatprep.subr.bf16.mxu0 0
    %278 = vmatpush1.bf16.msra.mxu0 %v265
    %279 = vmatprep.subr.bf16.mxu0 0
    %280 = vmatpush1.bf16.msra.mxu0 %v264
    %281 = vmatprep.subr.bf16.mxu0 0
    %282 = vmatpush1.bf16.msra.mxu0 %v263
    %283 = vmatprep.subr.bf16.mxu0 0
    %284 = vmatpush1.bf16.msra.mxu0 %v262
    %285 = vmatprep.subr.bf16.mxu0 0
    %286 = vmatpush1.bf16.msra.mxu0 %v261
    %287 = vmatprep.subr.bf16.mxu0 0
    %288 = vmatpush1.bf16.msra.mxu0 %v260
    %289 = vmatprep.subr.bf16.mxu0 0
    %290 = vmatpush1.bf16.msra.mxu0 %v259
    %291 = vmatprep.subr.bf16.mxu0 0
    %292 = vmatpush2.bf16.msra.mxu0 0
    %293 = vmatprep.subr.bf16.mxu0 0
    %294 = vmatpush2.bf16.msra.mxu0 0
    %295 = vmatprep.subr.bf16.mxu0 0
    %296 = vmatpush2.bf16.msra.mxu0 0
    %297 = vmatprep.subr.bf16.mxu0 0
    %298 = vmatpush2.bf16.msra.mxu0 0
    %299 = vmatprep.subr.bf16.mxu0 0
    %300 = vmatpush2.bf16.msra.mxu0 0
    %301 = vmatprep.subr.bf16.mxu0 0
    %302 = vmatpush2.bf16.msra.mxu0 0
    %303 = vmatprep.subr.bf16.mxu0 0
    %304 = vmatpush2.bf16.msra.mxu0 0
    %305 = vmatprep.subr.bf16.mxu0 0
    %306 = vmatpush2.bf16.msra.mxu0 0
    %307 = vmatprep.mubr.bf16.mxu0 0
    %308 = vmatmul.mubr.bf16.gmra.mxu0 %v203
    %v309 = vpop.f32.mrf.mxu0
    %v310 = vadd.f32 %v225, %v309
    %v311 = vpop.f32.mrf.mxu0
    %v312 = vpop.f32.mrf.mxu0
    %v313 = vpop.f32.mrf.mxu0
    %314 = vdwg.mxu0
    %v315 = vmax.f32 %v310, 0.0
    %v316 = vpack.c.bf16 %v315, %v315
    %v317 = vld [vmem:[#allocation8] sm:$0xff]
    %v318 = vld [vmem:[#allocation8 + $0x8] sm:$0xff]
    %v319 = vld [vmem:[#allocation8 + $0x10] sm:$0xff]
    %v320 = vld [vmem:[#allocation8 + $0x18] sm:$0xff]
    %v321 = vld [vmem:[#allocation8 + $0x20] sm:$0xff]
    %v322 = vld [vmem:[#allocation8 + $0x28] sm:$0xff]
    %v323 = vld [vmem:[#allocation8 + $0x30] sm:$0xff]
    %v324 = vld [vmem:[#allocation8 + $0x38] sm:$0xff]
    %v325 = vld [vmem:[#allocation8 + $0x40] sm:$0xff]
    %v326 = vld [vmem:[#allocation8 + $0x48] sm:$0xff]
    %v327 = vld [vmem:[#allocation8 + $0x50] sm:$0xff]
    %v328 = vld [vmem:[#allocation8 + $0x58] sm:$0xff]
    %v329 = vld [vmem:[#allocation8 + $0x60] sm:$0xff]
    %v330 = vld [vmem:[#allocation8 + $0x68] sm:$0xff]
    %v331 = vld [vmem:[#allocation8 + $0x70] sm:$0xff]
    %v332 = vld [vmem:[#allocation8 + $0x78] sm:$0xff]
    %v333 = vld [vmem:[%s6] sm:$0x3]
    %v335 = vlaneseq
    %v336 = vshrl.u32 %v335, 7
    %v337 = vsub.s32 0, %v336
    %v338 = vrot.slane %v333, %v337
    %v339 = vlaneseq
    %v340 = vshrl.u32 %v339, 7
    %v341 = vsub.s32 1, %v340
    %v342 = vrot.slane %v333, %v341
    %v361 = vunpack.c.l.b16 %v317
    %v362 = vunpack.c.h.b16 %v317
    %v363 = vunpack.c.l.b16 %v318
    %v364 = vunpack.c.h.b16 %v318
    %v365 = vunpack.c.l.b16 %v319
    %v366 = vunpack.c.h.b16 %v319
    %v367 = vunpack.c.l.b16 %v320
    %v368 = vunpack.c.h.b16 %v320
    %v369 = vunpack.c.l.b16 %v321
    %v370 = vunpack.c.h.b16 %v321
    %v371 = vunpack.c.l.b16 %v322
    %v372 = vunpack.c.h.b16 %v322
    %v373 = vunpack.c.l.b16 %v323
    %v374 = vunpack.c.h.b16 %v323
    %v375 = vunpack.c.l.b16 %v324
    %v376 = vunpack.c.h.b16 %v324
    %v377 = vunpack.c.l.b16 %v325
    %v378 = vunpack.c.h.b16 %v325
    %v379 = vunpack.c.l.b16 %v326
    %v380 = vunpack.c.h.b16 %v326
    %v381 = vunpack.c.l.b16 %v327
    %v382 = vunpack.c.h.b16 %v327
    %v383 = vunpack.c.l.b16 %v328
    %v384 = vunpack.c.h.b16 %v328
    %v385 = vunpack.c.l.b16 %v329
    %v386 = vunpack.c.h.b16 %v329
    %v387 = vunpack.c.l.b16 %v330
    %v388 = vunpack.c.h.b16 %v330
    %v389 = vunpack.c.l.b16 %v331
    %v390 = vunpack.c.h.b16 %v331
    %v391 = vunpack.c.l.b16 %v332
    %v392 = vunpack.c.h.b16 %v332
    %v393 = vpack.c.b16 %v363, %v361
    %v394 = vpack.c.b16 %v364, %v362
    %v395 = vpack.c.b16 %v367, %v365
    %v396 = vpack.c.b16 %v368, %v366
    %v397 = vpack.c.b16 %v371, %v369
    %v398 = vpack.c.b16 %v372, %v370
    %v399 = vpack.c.b16 %v375, %v373
    %v400 = vpack.c.b16 %v376, %v374
    %v401 = vpack.c.b16 %v379, %v377
    %v402 = vpack.c.b16 %v380, %v378
    %v403 = vpack.c.b16 %v383, %v381
    %v404 = vpack.c.b16 %v384, %v382
    %v405 = vpack.c.b16 %v387, %v385
    %v406 = vpack.c.b16 %v388, %v386
    %v407 = vpack.c.b16 %v391, %v389
    %v408 = vpack.c.b16 %v392, %v390
    %425 = vmatprep.subr.bf16.mxu0 %v408
    %426 = vmatpush1.bf16.msra.mxu0 %v407
    %427 = vmatprep.subr.bf16.mxu0 %v406
    %428 = vmatpush1.bf16.msra.mxu0 %v405
    %429 = vmatprep.subr.bf16.mxu0 %v404
    %430 = vmatpush1.bf16.msra.mxu0 %v403
    %431 = vmatprep.subr.bf16.mxu0 %v402
    %432 = vmatpush1.bf16.msra.mxu0 %v401
    %433 = vmatprep.subr.bf16.mxu0 %v400
    %434 = vmatpush1.bf16.msra.mxu0 %v399
    %435 = vmatprep.subr.bf16.mxu0 %v398
    %436 = vmatpush1.bf16.msra.mxu0 %v397
    %437 = vmatprep.subr.bf16.mxu0 %v396
    %438 = vmatpush1.bf16.msra.mxu0 %v395
    %439 = vmatprep.subr.bf16.mxu0 %v394
    %440 = vmatpush1.bf16.msra.mxu0 %v393
    %441 = vmatprep.subr.bf16.mxu0 0
    %442 = vmatpush2.bf16.msra.mxu0 0
    %443 = vmatprep.subr.bf16.mxu0 0
    %444 = vmatpush2.bf16.msra.mxu0 0
    %445 = vmatprep.subr.bf16.mxu0 0
    %446 = vmatpush2.bf16.msra.mxu0 0
    %447 = vmatprep.subr.bf16.mxu0 0
    %448 = vmatpush2.bf16.msra.mxu0 0
    %449 = vmatprep.subr.bf16.mxu0 0
    %450 = vmatpush2.bf16.msra.mxu0 0
    %451 = vmatprep.subr.bf16.mxu0 0
    %452 = vmatpush2.bf16.msra.mxu0 0
    %453 = vmatprep.subr.bf16.mxu0 0
    %454 = vmatpush2.bf16.msra.mxu0 0
    %455 = vmatprep.subr.bf16.mxu0 0
    %456 = vmatpush2.bf16.msra.mxu0 0
    %457 = vmatprep.mubr.bf16.mxu0 0
    %458 = vmatmul.mubr.bf16.gmra.mxu0 %v316
    %v459 = vpop.f32.mrf.mxu0
    %v460 = vadd.f32 %v338, %v459
    %v461 = vpop.f32.mrf.mxu0
    %v462 = vadd.f32 %v342, %v461
    %v463 = vpop.f32.mrf.mxu0
    %v464 = vpop.f32.mrf.mxu0
    %465 = vdwg.mxu0
    %v466 = vmax.f32 %v462, -20.0
    %v467 = vmin.f32 %v466, 2.0
    %v468 = vmul.f32 %v467, 1.442695
    %v469 = vpow.pop %v468
    %v470 = vld [vmem:[%s7] sm:$0xff]
    %v471 = vmul.f32 %v469, %v470
    %v472 = vadd.f32 %v460, %v471
    %v473 = vtanh.pop %v472
    %v474 = vld [vmem:[%s8] sm:$0x1]
    %v476 = vlaneseq
    %v477 = vshrl.u32 %v476, 7
    %v478 = vsub.s32 0, %v477
    %v479 = vrot.slane %v474, %v478
    %v481 = vmul.f32 %v473, %v479
    %v482 = vld [vmem:[%s9] sm:$0x1]
    %v484 = vlaneseq
    %v485 = vshrl.u32 %v484, 7
    %v486 = vsub.s32 0, %v485
    %v487 = vrot.slane %v482, %v486
    %v489 = vadd.f32 %v481, %v487
    %v490 = vlaneseq
    %v491 = vand.u32 %v490, 127
    %vm492 = vcmp.lt.s32.totalorder %v491, 4
    %v493 = vmul.f32 %v470, -0.5
    %v494 = vmul.f32 %v493, %v470
    %v495 = vsub.f32 %v494, %v467
    %v496 = vsub.f32 %v495, 0.9189385
    %v497 = vmul.f32 %v472, -2.0
    %v498 = vmax.f32 %v497, 0.0
    %v499 = vand.u32 2147483647, %v497
    %v500 = vsub.f32 0.0, %v499
    %v501 = vmul.f32 %v500, 1.442695
    %v502 = vpow.pop %v501
    %v503 = vadd.f32 %v502, 1.0
    %v504 = vlog2.pop %v503
    %v505 = vmul.f32 %v504, 0.6931472
    %v506 = vmul.f32 -0.5, %v502
    %v507 = vadd.f32 %v506, 1.0
    %v508 = vmul.f32 %v507, %v502
    %v509 = vand.u32 2147483647, %v502
    %vm510 = vcmp.lt.f32.partialorder %v509, 0.0004427343
    %v511 = vsel %vm510, %v508, %v505
    %v512 = vadd.f32 %v498, %v511
    %v513 = vsub.f32 0.6931472, %v472
    %v514 = vsub.f32 %v513, %v512
    %v515 = vmul.f32 %v514, 2.0
    %v516 = vsub.f32 %v496, %v515
    %v517 = vsel %vm492, %v516, 0.0
    %518 = vadd.xlane.f32.xlu0 %v517
    %v519 = vpop.xlane.xlu0 %518
    %v520 = vsel %vm492, %v489, %v519
    %521 = vst [vmem:[#allocation10] sm:$0xff] %v520
    // Predicated region
    $region58: #{tpu_custom_call.1} parent=1 // pred_check
      _
    $region59: #{tpu_custom_call.1} parent=1 // pred_check_branch
      %523 = sbr.rel (0) target = $region61
    $region60: #{tpu_custom_call.1} parent=1 // pred_region
      %s525 = ssub.s32 128, 128
      %526 = vsyncadd [#allocation4], %s525
      %s528 = sshll.u32 [#allocation10], 4
      %s529 = int_to_ptr.vmem [resolvable:$true] %s528
      %531 = dma.vmem_to_hbm [thread:$0]  %s529, 128, %s10, [#allocation4]
    $region61: #{tpu_custom_call.1} parent=1 // pred_fallthru
      _
    // Predicated region
    $region62: #{tpu_custom_call.1} parent=1 // pred_check
      _
    $region63: #{tpu_custom_call.1} parent=1 // pred_check_branch
      %533 = sbr.rel (0) target = $region65
    $region64: #{tpu_custom_call.1} parent=1 // pred_region
      %534 = dma.done [#allocation4], 128
    $region65: #{tpu_custom_call.1} parent=1 // pred_fallthru
      _
    %535 = vsyncpa [#allocation3], 1
    %536 = vsyncpa [#allocation6], 1
    %537 = vsyncpa [#allocation9], 1
    %538 = vsyncpa [#allocation4], 1

</llo_original>
